<compile_context>
chip_gen: v7x
topology: tpu7x:2x2x1
jax: 0.10.0
libtpu: 0.0.40
codegen_flags: <defaults>
</compile_context>

<pallas_src>
import math

import jax
import jax.numpy as jnp
from jax.experimental import pallas as pl
from jax.experimental.pallas import tpu as pltpu

_INV_SQRT2 = 0.7071067811865476  # 1/sqrt(2)

_MIB = 1024 * 1024


def _gelu_kernel(x_ref, o_ref):
    # exact GELU: x * 0.5 * (1 + erf(x / sqrt(2)))  ==  x * (0.5 * erf(x * c) + 0.5)
    x = x_ref[...].astype(jnp.float32)
    t = jax.lax.erf(x * jnp.float32(_INV_SQRT2))
    o_ref[...] = (x * (0.5 * t + 0.5)).astype(o_ref.dtype)


def _gelu_jnp(x):
    """Reference / tiny-tail path (same exact formula, f32 compute)."""
    xf = x.astype(jnp.float32)
    return (xf * (0.5 * jax.lax.erf(xf * jnp.float32(_INV_SQRT2)) + 0.5)).astype(x.dtype)


def _round_down(v, m):
    return max(m, (v // m) * m)


def _num_tensorcores():
    """Best-effort TensorCore-per-chip count (2 on v7x-class parts, else 1)."""
    try:
        kind = jax.devices()[0].device_kind.lower()
    except Exception:  # no device info available
        return 1
    if "v7" in kind or "7x" in kind:
        return 2
    return 1


def _gelu_2d(x2d, *, sub, max_block_bytes=8 * _MIB):
    """Run the kernel on a (rows, lane) slab; lane is a multiple of 128."""
    rows, lane = x2d.shape
    itemsize = jnp.dtype(x2d.dtype).itemsize
    bytes_per_row = lane * itemsize

    if rows <= sub:
        # Full-extent block: always legal regardless of (sub, 128) divisibility.
        tile_rows = rows
    else:
        rows_floor = (rows // sub) * sub                                # largest sub-multiple <= rows
        cap_vmem = _round_down(max_block_bytes // bytes_per_row, sub)   # block <= ~8 MiB
        tile_rows = max(sub, min(rows_floor, cap_vmem))

    nblocks = pl.cdiv(rows, tile_rows)  # last block may overhang; Pallas masks the store
    tile_bytes = tile_rows * bytes_per_row
    # in + out, double-buffered = 4x tile, plus headroom for Mosaic internal scratch.
    vmem_limit = int(min(48 * _MIB, max(32 * _MIB, 4 * tile_bytes + 16 * _MIB)))
    out_shape = jax.ShapeDtypeStruct((rows, lane), x2d.dtype)

    num_tc = _num_tensorcores()
    if num_tc >= 2 and nblocks >= 2 * num_tc:
        # Explicit 2-TensorCore sharding: leading CORE_PARALLEL axis, each core walks
        # its own contiguous range of large blocks.  Clamp the global block index so
        # the (at most num_tc-1) padded trailing steps re-visit the last real block
        # of the last core instead of running fully out of bounds.
        spc = pl.cdiv(nblocks, num_tc)  # steps per core

        def idx(c, i):
            return (jnp.minimum(c * spc + i, nblocks - 1), 0)

        try:
            return pl.pallas_call(
                _gelu_kernel,
                out_shape=out_shape,
                grid_spec=pltpu.PrefetchScalarGridSpec(
                    num_scalar_prefetch=0,
                    grid=(num_tc, spc),
                    in_specs=[pl.BlockSpec((tile_rows, lane), idx)],
                    out_specs=pl.BlockSpec((tile_rows, lane), idx),
                ),
                compiler_params=pltpu.CompilerParams(
                    dimension_semantics=(pltpu.CORE_PARALLEL, pltpu.ARBITRARY),
                    vmem_limit_bytes=vmem_limit,
                ),
            )(x2d)
        except Exception:
            pass  # fall back to the single-core schedule below

    return pl.pallas_call(
        _gelu_kernel,
        out_shape=out_shape,
        grid_spec=pltpu.PrefetchScalarGridSpec(
            num_scalar_prefetch=0,
            grid=(nblocks,),
            in_specs=[pl.BlockSpec((tile_rows, lane), lambda i: (i, 0))],
            out_specs=pl.BlockSpec((tile_rows, lane), lambda i: (i, 0)),
        ),
        compiler_params=pltpu.CompilerParams(
            dimension_semantics=("arbitrary",),
            vmem_limit_bytes=vmem_limit,
        ),
    )(x2d)


def gelu_pallas(x: jax.Array) -> jax.Array:
    orig_shape = x.shape
    n = x.size
    if n == 0:
        return x

    itemsize = jnp.dtype(x.dtype).itemsize
    # minimum sublane multiple for this dtype's (sub, 128) vreg packing
    sub = {4: 8, 2: 16, 1: 32}.get(itemsize, 8)

    flat = x.reshape(-1)  # free for a contiguous array

    # Widest lane count (multiple of 128) that exactly divides n -> pad-free reshape.
    lane = next((c for c in (1024, 512, 256, 128) if n % c == 0), None)

    if lane is not None:
        out = _gelu_2d(flat.reshape(n // lane, lane), sub=sub)
        return out.reshape(orig_shape)

    # Rare path: n is not a multiple of 128.  Run the bulk through the kernel and the
    # (<128-element) remainder with the same exact formula in plain XLA.
    # TODO(synk): fold the tail into the kernel output to avoid the concatenate's
    # extra HBM pass on this (rare) path.
    main = (n // 128) * 128
    tail_out = _gelu_jnp(flat[main:])
    if main == 0:
        return tail_out.reshape(orig_shape)
    head_out = _gelu_2d(flat[:main].reshape(main // 128, 128), sub=sub)
    return jnp.concatenate([head_out.reshape(-1), tail_out]).reshape(orig_shape)


if __name__ == "__main__":
    key = jax.random.PRNGKey(0)

    # NCHW-shaped input, consistent with how GELU is used inside CSwin blocks.
    x = jax.random.normal(key, (2, 4, 16, 16), dtype=jnp.float32)
    out = gelu_pallas(x)
    jax.block_until_ready(out)
    ref = _gelu_jnp(x)
    assert out.shape == x.shape and out.dtype == x.dtype
    assert jnp.allclose(out, ref, atol=1e-5, rtol=1e-5)

    # Multi-step grid + masked-overhang path (rows > sublane multiple, not divisible by it).
    x2 = jax.random.normal(jax.random.PRNGKey(1), (9, 1024), dtype=jnp.float32)
    out2 = gelu_pallas(x2)
    jax.block_until_ready(out2)
    assert jnp.allclose(out2, _gelu_jnp(x2), atol=1e-5, rtol=1e-5)

    # Non-multiple-of-128 tail path.
    x3 = jax.random.normal(jax.random.PRNGKey(2), (7, 13, 5), dtype=jnp.float32)
    out3 = gelu_pallas(x3)
    jax.block_until_ready(out3)
    assert jnp.allclose(out3, _gelu_jnp(x3), atol=1e-5, rtol=1e-5)

    # bf16 input: f32 compute inside the kernel, bf16 store (halves write traffic).
    xb = jax.random.normal(jax.random.PRNGKey(3), (2, 4, 16, 16)).astype(jnp.bfloat16)
    outb = gelu_pallas(xb)
    jax.block_until_ready(outb)
    assert outb.dtype == jnp.bfloat16
    assert jnp.allclose(outb.astype(jnp.float32), _gelu_jnp(xb).astype(jnp.float32),
                        atol=2e-2, rtol=2e-2)

    print("KERNEL_OK")
</pallas_src>

<mosaic_0001>
module attributes {stable_mosaic.version = 11 : i64} {
  func.func @_gelu_kernel(%arg0: i32, %arg1: memref<2x1024xf32, #tpu.memory_space<vmem>>, %arg2: memref<2x1024xf32, #tpu.memory_space<vmem>>) attributes {dimension_semantics = [#tpu.dimension_semantics<arbitrary>], iteration_bounds = array<i64: 1>, scalar_prefetch = 0 : i64, scratch_operands = 0 : i64, tpu.core_type = #tpu.core_type<tc>, window_params = [{transform_indices = @transform_0, window_bounds = array<i64: 2, 1024>}, {transform_indices = @transform_1, window_bounds = array<i64: 2, 1024>}]} {
    %c0 = arith.constant 0 : index
    %c0_0 = arith.constant 0 : index
    %0 = vector.load %arg1[%c0, %c0_0] : memref<2x1024xf32, #tpu.memory_space<vmem>>, vector<2x1024xf32>
    %cst = arith.constant 0.707106769 : f32
    %1 = vector.broadcast %cst : f32 to vector<2x1024xf32>
    %2 = arith.mulf %0, %1 : vector<2x1024xf32>
    %3 = math.erf %2 : vector<2x1024xf32>
    %cst_1 = arith.constant 5.000000e-01 : f32
    %4 = vector.broadcast %cst_1 : f32 to vector<2x1024xf32>
    %5 = arith.mulf %4, %3 : vector<2x1024xf32>
    %cst_2 = arith.constant 5.000000e-01 : f32
    %6 = vector.broadcast %cst_2 : f32 to vector<2x1024xf32>
    %7 = arith.addf %5, %6 : vector<2x1024xf32>
    %8 = arith.mulf %0, %7 : vector<2x1024xf32>
    %c0_3 = arith.constant 0 : index
    %c0_4 = arith.constant 0 : index
    %9 = vector.load %arg2[%c0_3, %c0_4] : memref<2x1024xf32, #tpu.memory_space<vmem>>, vector<2x1024xf32>
    tpu.vector_store %arg2[%c0_3, %c0_4], %8 {strides = array<i32>} : memref<2x1024xf32, #tpu.memory_space<vmem>>, vector<2x1024xf32>,
    return
  }
  func.func @transform_0(%arg0: i32) -> (i32, i32) {
    %c0_i32 = arith.constant 0 : i32
    %c0_i32_0 = arith.constant 0 : i32
    return %arg0, %c0_i32 : i32, i32
  }
  func.func @transform_1(%arg0: i32) -> (i32, i32) {
    %c0_i32 = arith.constant 0 : i32
    %c0_i32_0 = arith.constant 0 : i32
    return %arg0, %c0_i32 : i32, i32
  }
}

</mosaic_0001>

<llo_original>
// kernel: tpu_custom_call.1
$region0: #{tpu_custom_call.1}
  #allocation0 [shape = 'u32[]', space=smem, size = 0x4, offset = 0x4, fixed_abs, tag = 'smem constant byte address 0x4 - core index']
  #allocation1 [shape = 'u32[144,128]{1,0:T(1,128)}', space=vmem, size = 0x12000, scoped, tag = 'internal scratch']
  %s0 = inlined_call_operand.hbm [shape: f32[2,1024], index: 0, kind: input, shape index: {}]
  %s1 = inlined_call_operand.hbm [shape: f32[2,1024], index: 1, kind: output, shape index: {}]
  %s2 = sld [smem:[#allocation0]]
  $region18: #{tpu_custom_call.1} parent=0
    _
  %s4 = ssub.s32 1, %s2
  %s5 = scalar_select 0, %s4, %s2
  $region1: #{tpu_custom_call.1} parent=0
    #allocation2 [shape = 'u8[8192]{0}', space=vmem, size = 0x2000, scoped, tag = 'input window, operand 0, single buffered']
    #allocation3 [shape = 's32[1]{0}', space=sflag, size = 0x4, scoped, tag = 'scoped memory for tpu_custom_call.1']
    #allocation4 [shape = 's32[1]{0}', space=sflag, size = 0x4, scoped, tag = 'scoped memory for tpu_custom_call.1']
    #allocation5 [shape = 'u8[8192]{0}', space=vmem, size = 0x2000, scoped, tag = 'output window, operand 0, single buffered']
    %6 = vsyncpa [#allocation3], 0
    %7 = vsyncpa [#allocation4], 0
    // Predicated region
    $region2: #{tpu_custom_call.1} parent=1 // pred_check
      _
    $region3: #{tpu_custom_call.1} parent=1 // pred_check_branch
      %9 = sbr.rel (0) target = $region5
    $region4: #{tpu_custom_call.1} parent=1 // pred_region
      %s11 = ssub.s32 256, 256
      %12 = vsyncadd [#allocation3], %s11
      %s14 = sshll.u32 [#allocation2], 4
      %s15 = int_to_ptr.vmem [resolvable:$true] %s14
      %17 = dma.hbm_to_vmem [thread:$0]  %s0, 256, %s15, [#allocation3]
    $region5: #{tpu_custom_call.1} parent=1 // pred_fallthru
      _
    // Predicated region
    $region6: #{tpu_custom_call.1} parent=1 // pred_check
      _
    $region7: #{tpu_custom_call.1} parent=1 // pred_check_branch
      %19 = sbr.rel (0) target = $region9
    $region8: #{tpu_custom_call.1} parent=1 // pred_region
      %20 = dma.done [#allocation3], 256
    $region9: #{tpu_custom_call.1} parent=1 // pred_fallthru
      _
    %v21 = vld [vmem:[#allocation2] sm:$0xff]
    %v22 = vld [vmem:[#allocation2 + $0x8] sm:$0xff]
    %v23 = vmul.f32 %v21, 0.70710677
    %v24 = vmul.f32 %v22, 0.70710677
    %v25 = verf.f32.pop %v23
    %v26 = verf.f32.pop %v24
    %v27 = vmul.f32 %v25, 0.5
    %v28 = vmul.f32 %v26, 0.5
    %v29 = vadd.f32 %v27, 0.5
    %v30 = vadd.f32 %v28, 0.5
    %v31 = vmul.f32 %v21, %v29
    %v32 = vmul.f32 %v22, %v30
    %33 = vst [vmem:[#allocation5] sm:$0xff] %v31
    %34 = vst [vmem:[#allocation5 + $0x8] sm:$0xff] %v32
    // Predicated region
    $region10: #{tpu_custom_call.1} parent=1 // pred_check
      _
    $region11: #{tpu_custom_call.1} parent=1 // pred_check_branch
      %36 = sbr.rel (0) target = $region13
    $region12: #{tpu_custom_call.1} parent=1 // pred_region
      %s38 = ssub.s32 256, 256
      %39 = vsyncadd [#allocation4], %s38
      %s41 = sshll.u32 [#allocation5], 4
      %s42 = int_to_ptr.vmem [resolvable:$true] %s41
      %44 = dma.vmem_to_hbm [thread:$0]  %s42, 256, %s1, [#allocation4]
    $region13: #{tpu_custom_call.1} parent=1 // pred_fallthru
      _
    // Predicated region
    $region14: #{tpu_custom_call.1} parent=1 // pred_check
      _
    $region15: #{tpu_custom_call.1} parent=1 // pred_check_branch
      %46 = sbr.rel (0) target = $region17
    $region16: #{tpu_custom_call.1} parent=1 // pred_region
      %47 = dma.done [#allocation4], 256
    $region17: #{tpu_custom_call.1} parent=1 // pred_fallthru
      _
    %48 = vsyncpa [#allocation3], 1
    %49 = vsyncpa [#allocation4], 1

</llo_original>
